<compile_context>
chip_gen: v5e
topology: v5e:2x2
jax: 0.10.0
libtpu: 0.0.40
codegen_flags: <defaults>
</compile_context>

<pallas_src>
import functools

import jax
import jax.numpy as jnp
from jax.experimental import pallas as pl
from jax.experimental.pallas import tpu as pltpu

BETA = 0.1


def _round_up(x, m):
    return ((x + m - 1) // m) * m


def entropy_loss_kernel(prob_ref, label_ref, nll_ref, ent_ref, *, n_valid, tm):
    # prob_ref: (tm, C) logits, label_ref: (tm, 1) int32
    # nll_ref / ent_ref: (8, 1) per-block partial sums (row 0 holds the value).
    i = pl.program_id(0)
    logits = prob_ref[...].astype(jnp.float32)                    # (tm, C)

    # Numerically-stable log_softmax along the class (lane) axis, one exp pass.
    m = jnp.max(logits, axis=1, keepdims=True)                    # (tm, 1)
    shifted = logits - m
    e = jnp.exp(shifted)                                          # (tm, C)  single exp
    sumexp = jnp.sum(e, axis=1, keepdims=True)                    # (tm, 1)
    logp = shifted - jnp.log(sumexp)                              # (tm, C)
    p = e * pl.reciprocal(sumexp)                                 # softmax, no 2nd exp

    # Entropy per row: -(p * logp).sum(dim=1)
    entropy = -jnp.sum(p * logp, axis=1, keepdims=True)           # (tm, 1)

    # NLL per row: -logp[row, label[row]] via one-hot mask (no gather).
    class_ids = jax.lax.broadcasted_iota(jnp.int32, logits.shape, 1)
    onehot = (class_ids == label_ref[...]).astype(jnp.float32)    # (tm, C)
    nll = -jnp.sum(logp * onehot, axis=1, keepdims=True)          # (tm, 1)

    # Mask padded tail rows (rows >= n_valid contribute zero).
    row_ids = i * tm + jax.lax.broadcasted_iota(jnp.int32, (tm, 1), 0)
    valid = (row_ids < n_valid).astype(jnp.float32)               # (tm, 1)

    nll_sum = jnp.sum(nll * valid, axis=0, keepdims=True)         # (1, 1)
    ent_sum = jnp.sum(entropy * valid, axis=0, keepdims=True)     # (1, 1)

    # Write partial sums into row 0 of a tiling-legal (8, 1) output block.
    row0 = jax.lax.broadcasted_iota(jnp.int32, (8, 1), 0) == 0
    nll_ref[...] = jnp.where(row0, nll_sum, 0.0)
    ent_ref[...] = jnp.where(row0, ent_sum, 0.0)


def entropy_loss(prob, label, beta=BETA, tm=512):
    """prob: (N, C) float32/bf16 logits, label: (N,) int -> (loss_mean, entropy_mean)."""
    N, C = prob.shape

    # Pick a row tile: multiple of 8, no larger than needed, capped so the
    # double-buffered input block stays well inside scoped VMEM (incl. v7x).
    vmem_cap_rows = max(8, (((12 * 1024 * 1024) // (C * 4)) // 8) * 8)
    tm = max(8, min(_round_up(tm, 8), _round_up(N, 8), vmem_cap_rows))

    n_pad = _round_up(N, tm)
    if n_pad != N:
        prob = jnp.pad(prob, ((0, n_pad - N), (0, 0)))
        label = jnp.pad(label, (0, n_pad - N))
    label2d = label.astype(jnp.int32).reshape(n_pad, 1)

    grid = (n_pad // tm,)
    g = grid[0]

    nll_part, ent_part = pl.pallas_call(
        functools.partial(entropy_loss_kernel, n_valid=N, tm=tm),
        out_shape=(
            jax.ShapeDtypeStruct((8 * g, 1), jnp.float32),
            jax.ShapeDtypeStruct((8 * g, 1), jnp.float32),
        ),
        grid_spec=pltpu.PrefetchScalarGridSpec(
            num_scalar_prefetch=0,
            grid=grid,
            in_specs=[
                pl.BlockSpec((tm, C), lambda i: (i, 0)),
                pl.BlockSpec((tm, 1), lambda i: (i, 0)),
            ],
            out_specs=[
                pl.BlockSpec((8, 1), lambda i: (i, 0)),
                pl.BlockSpec((8, 1), lambda i: (i, 0)),
            ],
        ),
        compiler_params=pltpu.CompilerParams(
            dimension_semantics=("parallel",),
            vmem_limit_bytes=48 * 1024 * 1024,
        ),
    )(prob, label2d)

    # Non-row-0 entries are zero, so a flat sum gives the batch totals.
    nll_sum = jnp.sum(nll_part)
    ent_sum = jnp.sum(ent_part)
    loss = (nll_sum - beta * ent_sum) / N
    return loss, ent_sum / N


def entropy_loss_ref(prob, label, beta=BETA):
    logp = jax.nn.log_softmax(prob.astype(jnp.float32), axis=1)
    entropy = -jnp.sum(jnp.exp(logp) * logp, axis=1)
    nll = -jnp.take_along_axis(logp, label[:, None].astype(jnp.int32), axis=1)[:, 0]
    return jnp.mean(nll - beta * entropy), jnp.mean(entropy)


if __name__ == "__main__":
    key = jax.random.PRNGKey(0)
    k1, k2, k3, k4 = jax.random.split(key, 4)

    # Case 1: small, tile-aligned batch.
    N, C = 16, 32
    prob = jax.random.normal(k1, (N, C), dtype=jnp.float32)
    label = jax.random.randint(k2, (N,), 0, C, dtype=jnp.int32)
    loss, ent_mean = entropy_loss(prob, label)
    jax.block_until_ready((loss, ent_mean))
    ref_loss, ref_ent = entropy_loss_ref(prob, label)
    assert jnp.allclose(loss, ref_loss, atol=1e-5), (loss, ref_loss)
    assert jnp.allclose(ent_mean, ref_ent, atol=1e-5), (ent_mean, ref_ent)

    # Case 2: batch not divisible by the tile (exercises padding + masking).
    N2, C2 = 20, 32
    prob2 = jax.random.normal(k3, (N2, C2), dtype=jnp.float32)
    label2 = jax.random.randint(k4, (N2,), 0, C2, dtype=jnp.int32)
    loss2, ent_mean2 = entropy_loss(prob2, label2)
    jax.block_until_ready((loss2, ent_mean2))
    ref_loss2, ref_ent2 = entropy_loss_ref(prob2, label2)
    assert jnp.allclose(loss2, ref_loss2, atol=1e-5), (loss2, ref_loss2)
    assert jnp.allclose(ent_mean2, ref_ent2, atol=1e-5), (ent_mean2, ref_ent2)

    print("KERNEL_OK")
</pallas_src>

<mosaic_0001>
module attributes {stable_mosaic.version = 11 : i64} {
  func.func @entropy_loss_kernel(%arg0: i32, %arg1: memref<16x32xf32, #tpu.memory_space<vmem>>, %arg2: memref<16x1xi32, #tpu.memory_space<vmem>>, %arg3: memref<8x1xf32, #tpu.memory_space<vmem>>, %arg4: memref<8x1xf32, #tpu.memory_space<vmem>>) attributes {dimension_semantics = [#tpu.dimension_semantics<parallel>], iteration_bounds = array<i64: 1>, scalar_prefetch = 0 : i64, scratch_operands = 0 : i64, tpu.core_type = #tpu.core_type<tc>, window_params = [{transform_indices = @transform_0, window_bounds = array<i64: 16, 32>}, {transform_indices = @transform_1, window_bounds = array<i64: 16, 1>}, {transform_indices = @transform_2, window_bounds = array<i64: 8, 1>}, {transform_indices = @transform_3, window_bounds = array<i64: 8, 1>}]} {
    %c0 = arith.constant 0 : index
    %c0_0 = arith.constant 0 : index
    %0 = vector.load %arg1[%c0, %c0_0] : memref<16x32xf32, #tpu.memory_space<vmem>>, vector<16x32xf32>
    %cst = arith.constant dense<0xFF800000> : vector<16xf32>
    %1 = vector.multi_reduction <maximumf>, %0, %cst [1] : vector<16x32xf32> to vector<16xf32>
    %2 = vector.shape_cast %1 : vector<16xf32> to vector<16x1xf32>
    %3 = vector.broadcast %2 : vector<16x1xf32> to vector<16x32xf32>
    %4 = arith.subf %0, %3 : vector<16x32xf32>
    %5 = math.exp %4 : vector<16x32xf32>
    %cst_1 = arith.constant dense<0.000000e+00> : vector<16xf32>
    %6 = vector.multi_reduction <add>, %5, %cst_1 [1] : vector<16x32xf32> to vector<16xf32>
    %7 = vector.shape_cast %6 : vector<16xf32> to vector<16x1xf32>
    %8 = math.log %7 : vector<16x1xf32>
    %9 = vector.broadcast %8 : vector<16x1xf32> to vector<16x32xf32>
    %10 = arith.subf %4, %9 : vector<16x32xf32>
    %11 = tpu.reciprocal %7 : vector<16x1xf32> -> vector<16x1xf32>
    %12 = vector.broadcast %11 : vector<16x1xf32> to vector<16x32xf32>
    %13 = arith.mulf %5, %12 : vector<16x32xf32>
    %14 = arith.mulf %13, %10 : vector<16x32xf32>
    %cst_2 = arith.constant dense<0.000000e+00> : vector<16xf32>
    %15 = vector.multi_reduction <add>, %14, %cst_2 [1] : vector<16x32xf32> to vector<16xf32>
    %16 = vector.shape_cast %15 : vector<16xf32> to vector<16x1xf32>
    %cst_3 = arith.constant 0.000000e+00 : f32
    %17 = vector.broadcast %cst_3 : f32 to vector<16x1xf32>
    %18 = arith.subf %17, %16 : vector<16x1xf32>
    %19 = tpu.iota {dimensions = array<i32: 1>} : vector<16x32xi32>
    %c0_4 = arith.constant 0 : index
    %c0_5 = arith.constant 0 : index
    %20 = vector.load %arg2[%c0_4, %c0_5] : memref<16x1xi32, #tpu.memory_space<vmem>>, vector<16x1xi32>
    %21 = vector.broadcast %20 : vector<16x1xi32> to vector<16x32xi32>
    %22 = arith.cmpi eq, %19, %21 : vector<16x32xi32>
    %23 = arith.extui %22 : vector<16x32xi1> to vector<16x32xi32>
    %24 = arith.sitofp %23 : vector<16x32xi32> to vector<16x32xf32>
    %25 = arith.mulf %10, %24 : vector<16x32xf32>
    %cst_6 = arith.constant dense<0.000000e+00> : vector<16xf32>
    %26 = vector.multi_reduction <add>, %25, %cst_6 [1] : vector<16x32xf32> to vector<16xf32>
    %27 = vector.shape_cast %26 : vector<16xf32> to vector<16x1xf32>
    %cst_7 = arith.constant 0.000000e+00 : f32
    %28 = vector.broadcast %cst_7 : f32 to vector<16x1xf32>
    %29 = arith.subf %28, %27 : vector<16x1xf32>
    %c16_i32 = arith.constant 16 : i32
    %30 = arith.muli %arg0, %c16_i32 : i32
    %31 = tpu.iota {dimensions = array<i32: 0>} : vector<16x1xi32>
    %32 = vector.broadcast %30 : i32 to vector<16x1xi32>
    %33 = arith.addi %32, %31 : vector<16x1xi32>
    %c16_i32_8 = arith.constant 16 : i32
    %34 = vector.broadcast %c16_i32_8 : i32 to vector<16x1xi32>
    %35 = arith.cmpi slt, %33, %34 : vector<16x1xi32>
    %36 = arith.extui %35 : vector<16x1xi1> to vector<16x1xi32>
    %37 = arith.sitofp %36 : vector<16x1xi32> to vector<16x1xf32>
    %38 = arith.mulf %29, %37 : vector<16x1xf32>
    %cst_9 = arith.constant dense<0.000000e+00> : vector<1xf32>
    %39 = vector.multi_reduction <add>, %38, %cst_9 [0] : vector<16x1xf32> to vector<1xf32>
    %40 = vector.shape_cast %39 : vector<1xf32> to vector<1x1xf32>
    %41 = arith.mulf %18, %37 : vector<16x1xf32>
    %cst_10 = arith.constant dense<0.000000e+00> : vector<1xf32>
    %42 = vector.multi_reduction <add>, %41, %cst_10 [0] : vector<16x1xf32> to vector<1xf32>
    %43 = vector.shape_cast %42 : vector<1xf32> to vector<1x1xf32>
    %44 = tpu.iota {dimensions = array<i32: 0>} : vector<8x1xi32>
    %c0_i32 = arith.constant 0 : i32
    %45 = vector.broadcast %c0_i32 : i32 to vector<8x1xi32>
    %46 = arith.cmpi eq, %44, %45 : vector<8x1xi32>
    %cst_11 = arith.constant 0.000000e+00 : f32
    %47 = vector.shape_cast %40 : vector<1x1xf32> to vector<1x1xf32>
    %48 = vector.broadcast %47 : vector<1x1xf32> to vector<8x1xf32>
    %49 = vector.broadcast %cst_11 : f32 to vector<8x1xf32>
    %50 = arith.select %46, %48, %49 : vector<8x1xi1>, vector<8x1xf32>
    %c0_12 = arith.constant 0 : index
    %c0_13 = arith.constant 0 : index
    %51 = vector.load %arg3[%c0_12, %c0_13] : memref<8x1xf32, #tpu.memory_space<vmem>>, vector<8x1xf32>
    tpu.vector_store %arg3[%c0_12, %c0_13], %50 {strides = array<i32>} : memref<8x1xf32, #tpu.memory_space<vmem>>, vector<8x1xf32>,
    %cst_14 = arith.constant 0.000000e+00 : f32
    %52 = vector.shape_cast %43 : vector<1x1xf32> to vector<1x1xf32>
    %53 = vector.broadcast %52 : vector<1x1xf32> to vector<8x1xf32>
    %54 = vector.broadcast %cst_14 : f32 to vector<8x1xf32>
    %55 = arith.select %46, %53, %54 : vector<8x1xi1>, vector<8x1xf32>
    %c0_15 = arith.constant 0 : index
    %c0_16 = arith.constant 0 : index
    %56 = vector.load %arg4[%c0_15, %c0_16] : memref<8x1xf32, #tpu.memory_space<vmem>>, vector<8x1xf32>
    tpu.vector_store %arg4[%c0_15, %c0_16], %55 {strides = array<i32>} : memref<8x1xf32, #tpu.memory_space<vmem>>, vector<8x1xf32>,
    return
  }
  func.func @transform_0(%arg0: i32) -> (i32, i32) {
    %c0_i32 = arith.constant 0 : i32
    %c0_i32_0 = arith.constant 0 : i32
    return %arg0, %c0_i32 : i32, i32
  }
  func.func @transform_1(%arg0: i32) -> (i32, i32) {
    %c0_i32 = arith.constant 0 : i32
    %c0_i32_0 = arith.constant 0 : i32
    return %arg0, %c0_i32 : i32, i32
  }
  func.func @transform_2(%arg0: i32) -> (i32, i32) {
    %c0_i32 = arith.constant 0 : i32
    %c0_i32_0 = arith.constant 0 : i32
    return %arg0, %c0_i32 : i32, i32
  }
  func.func @transform_3(%arg0: i32) -> (i32, i32) {
    %c0_i32 = arith.constant 0 : i32
    %c0_i32_0 = arith.constant 0 : i32
    return %arg0, %c0_i32 : i32, i32
  }
}

</mosaic_0001>

<llo_original>
// kernel: tpu_custom_call.1
$region0: #{tpu_custom_call.1}
  #allocation0 [shape = 'u32[]', space=smem, size = 0x4, offset = 0x4, fixed_abs, tag = 'smem constant byte address 0x4 - core index']
  #allocation1 [shape = 'u32[72,128]{1,0:T(1,128)}', space=vmem, size = 0x9000, scoped, tag = 'internal scratch']
  %s0 = inlined_call_operand.vmem [shape: f32[16,32], index: 0, kind: input, shape index: {}]
  %s1 = inlined_call_operand.vmem [shape: s32[16,1], index: 1, kind: input, shape index: {}]
  %s2 = inlined_call_operand.vmem [shape: f32[8,1], index: 2, kind: output, shape index: {0}]
  %s3 = inlined_call_operand.vmem [shape: f32[8,1], index: 3, kind: output, shape index: {1}]
  %4 = xla_tuple %s2, %s3
  %s5 = sld [smem:[#allocation0]]
  $region26: #{tpu_custom_call.1} parent=0
    _
  %s7 = ssub.s32 1, %s5
  %s8 = scalar_select 0, %s7, %s5
  // Predicated region
  $region2: #{tpu_custom_call.1} parent=0 // pred_check
    _
  $region3: #{tpu_custom_call.1} parent=0 // pred_check_branch
    %10 = sbr.rel (0) target = $region5
  $region4: #{tpu_custom_call.1} parent=0 // pred_region
    _
  $region5: #{tpu_custom_call.1} parent=0 // pred_fallthru
    _
  // Predicated region
  $region6: #{tpu_custom_call.1} parent=0 // pred_check
    _
  $region7: #{tpu_custom_call.1} parent=0 // pred_check_branch
    %12 = sbr.rel (0) target = $region9
  $region8: #{tpu_custom_call.1} parent=0 // pred_region
    _
  $region9: #{tpu_custom_call.1} parent=0 // pred_fallthru
    _
  %v13 = vld [vmem:[%s0] sm:$0xff]
  %v14 = vld [vmem:[%s0 + $0x8] sm:$0xff]
  %vm15 = vcmask 261120
  %v16 = vsel %vm15, %v13, -inf
  %17 = vmax.xlane.f32.xlu0 %v16
  %v18 = vpop.xlane.xlu0 %17
  %v19 = vsel %vm15, %v14, -inf
  %20 = vmax.xlane.f32.xlu0 %v19
  %v21 = vpop.xlane.xlu0 %20
  %v22 = vsub.f32 %v13, %v18
  %v23 = vsub.f32 %v14, %v21
  %v24 = vmul.f32 %v22, 1.442695
  %v25 = vpow.pop %v24
  %v26 = vmul.f32 %v23, 1.442695
  %v27 = vpow.pop %v26
  %v28 = vsel %vm15, %v25, 0.0
  %29 = vadd.xlane.f32.xlu0 %v28
  %v30 = vpop.xlane.xlu0 %29
  %v31 = vsel %vm15, %v27, 0.0
  %32 = vadd.xlane.f32.xlu0 %v31
  %v33 = vpop.xlane.xlu0 %32
  %v34 = vlog2.pop %v30
  %v35 = vmul.f32 %v34, 0.6931472
  %v36 = vlog2.pop %v33
  %v37 = vmul.f32 %v36, 0.6931472
  %v38 = vsub.f32 %v22, %v35
  %v39 = vsub.f32 %v23, %v37
  %v40 = vrcp.pop %v30
  %v41 = vmul.f32 %v30, %v40
  %v42 = vsub.f32 1.0, %v41
  %v43 = vmul.f32 %v40, %v42
  %v44 = vadd.f32 %v40, %v43
  %vm45 = vweird.f32 %v30
  %vm46 = vweird.f32 %v40
  %vm47 = vmor %vm45, %vm46
  %v48 = vsel %vm47, %v40, %v44
  %v49 = vand.u32 2147483647, %v30
  %vm50 = vcmp.eq.f32.partialorder %v49, 8.507059e+37
  %v51 = vand.u32 %v30, 2147483648
  %v52 = vor.u32 1.1754944e-38, %v51
  %v53 = vsel %vm50, %v52, %v48
  %v54 = vrcp.pop %v33
  %v55 = vmul.f32 %v33, %v54
  %v56 = vsub.f32 1.0, %v55
  %v57 = vmul.f32 %v54, %v56
  %v58 = vadd.f32 %v54, %v57
  %vm59 = vweird.f32 %v33
  %vm60 = vweird.f32 %v54
  %vm61 = vmor %vm59, %vm60
  %v62 = vsel %vm61, %v54, %v58
  %v63 = vand.u32 2147483647, %v33
  %vm64 = vcmp.eq.f32.partialorder %v63, 8.507059e+37
  %v65 = vand.u32 %v33, 2147483648
  %v66 = vor.u32 1.1754944e-38, %v65
  %v67 = vsel %vm64, %v66, %v62
  %v68 = vmul.f32 %v25, %v53
  %v69 = vmul.f32 %v27, %v67
  %v70 = vmul.f32 %v68, %v38
  %v71 = vmul.f32 %v69, %v39
  %v72 = vsel %vm15, %v70, 0.0
  %73 = vadd.xlane.f32.xlu0 %v72
  %v74 = vpop.xlane.xlu0 %73
  %v75 = vsel %vm15, %v71, 0.0
  %76 = vadd.xlane.f32.xlu0 %v75
  %v77 = vpop.xlane.xlu0 %76
  %v78 = vsub.f32 0.0, %v74
  %v79 = vsub.f32 0.0, %v77
  %v80 = vlaneseq
  %v81 = vand.u32 %v80, 127
  %v82 = vld [vmem:[%s1] sm:$0xff]
  %v83 = vld [vmem:[%s1 + $0x8] sm:$0xff]
  %84 = vset.pattern.permute.xlu0 0
  %85 = vperm.xlu0 %84, %v82
  %v86 = vpop.permute.xlu0 %85
  %87 = vset.pattern.permute.xlu0 0
  %88 = vperm.xlu0 %87, %v83
  %v89 = vpop.permute.xlu0 %88
  %vm90 = vcmp.eq.s32.totalorder %v81, %v86
  %vm91 = vcmp.eq.s32.totalorder %v81, %v89
  %v92 = vsel %vm90, 1, 0
  %v93 = vsel %vm91, 1, 0
  %v94 = vcvt.s32.f32 %v92
  %v95 = vcvt.s32.f32 %v93
  %v96 = vmul.f32 %v38, %v94
  %v97 = vmul.f32 %v39, %v95
  %v98 = vsel %vm15, %v96, 0.0
  %99 = vadd.xlane.f32.xlu0 %v98
  %v100 = vpop.xlane.xlu0 %99
  %v101 = vsel %vm15, %v97, 0.0
  %102 = vadd.xlane.f32.xlu0 %v101
  %v103 = vpop.xlane.xlu0 %102
  %v104 = vsub.f32 0.0, %v100
  %v105 = vsub.f32 0.0, %v103
  %s106 = smul.u32 0, 16
  %v107 = vlaneseq
  %v108 = vshrl.u32 %v107, 7
  %v109 = vadd.s32 %v108, 8
  %v110 = vstv %s106
  %v111 = vadd.s32 %v110, %v108
  %v112 = vadd.s32 %v110, %v109
  %vm113 = vcmp.lt.s32.totalorder %v111, 16
  %vm114 = vcmp.lt.s32.totalorder %v112, 16
  %v115 = vsel %vm113, 1, 0
  %v116 = vsel %vm114, 1, 0
  %v117 = vcvt.s32.f32 %v115
  %v118 = vcvt.s32.f32 %v116
  %v119 = vmul.f32 %v104, %v117
  %v120 = vmul.f32 %v105, %v118
  %v121 = vadd.f32 %v119, %v120
  %v122 = vrot.slane %v121, 4
  %v123 = vadd.f32 %v121, %v122
  %v124 = vrot.slane %v123, 2
  %v125 = vadd.f32 %v123, %v124
  %v126 = vrot.slane %v125, 1
  %v127 = vadd.f32 %v125, %v126
  %v128 = vmul.f32 %v78, %v117
  %v129 = vmul.f32 %v79, %v118
  %v130 = vadd.f32 %v128, %v129
  %v131 = vrot.slane %v130, 4
  %v132 = vadd.f32 %v130, %v131
  %v133 = vrot.slane %v132, 2
  %v134 = vadd.f32 %v132, %v133
  %v135 = vrot.slane %v134, 1
  %v136 = vadd.f32 %v134, %v135
  %vm137 = vcmp.eq.s32.totalorder %v108, 0
  %v138 = vsel %vm137, %v127, 0.0
  %vm139 = vcmask 7168
  %140 = vst.msk [vmem:[%s2] sm:$0xff] %vm139, %v138
  %v141 = vsel %vm137, %v136, 0.0
  %142 = vst.msk [vmem:[%s3] sm:$0xff] %vm139, %v141
  // Predicated region
  $region10: #{tpu_custom_call.1} parent=0 // pred_check
    _
  $region11: #{tpu_custom_call.1} parent=0 // pred_check_branch
    %144 = sbr.rel (0) target = $region13
  $region12: #{tpu_custom_call.1} parent=0 // pred_region
    _
  $region13: #{tpu_custom_call.1} parent=0 // pred_fallthru
    _
  // Predicated region
  $region14: #{tpu_custom_call.1} parent=0 // pred_check
    _
  $region15: #{tpu_custom_call.1} parent=0 // pred_check_branch
    %146 = sbr.rel (0) target = $region17
  $region16: #{tpu_custom_call.1} parent=0 // pred_region
    _
  $region17: #{tpu_custom_call.1} parent=0 // pred_fallthru
    _
  // Predicated region
  $region18: #{tpu_custom_call.1} parent=0 // pred_check
    _
  $region19: #{tpu_custom_call.1} parent=0 // pred_check_branch
    %148 = sbr.rel (0) target = $region21
  $region20: #{tpu_custom_call.1} parent=0 // pred_region
    _
  $region21: #{tpu_custom_call.1} parent=0 // pred_fallthru
    _
  // Predicated region
  $region22: #{tpu_custom_call.1} parent=0 // pred_check
    _
  $region23: #{tpu_custom_call.1} parent=0 // pred_check_branch
    %150 = sbr.rel (0) target = $region25
  $region24: #{tpu_custom_call.1} parent=0 // pred_region
    _
  $region25: #{tpu_custom_call.1} parent=0 // pred_fallthru
    _

</llo_original>
